<compile_context>
chip_gen: v5e
topology: v5e:2x2
jax: 0.10.0
libtpu: 0.0.40
codegen_flags: <defaults>
</compile_context>

<pallas_src>
import jax
import jax.numpy as jnp
from jax.experimental import pallas as pl
from jax.experimental.pallas import tpu as pltpu


def _cdiv(a, b):
    return -(-a // b)


def _round_up(v, m):
    return _cdiv(v, m) * m


def _slot_classifier_kernel(x_ref, w_ref, b_ref, o_ref, acc_ref):
    # x_ref: [tm, tk], w_ref: [tk, tn] (pre-transposed weight), b_ref: [1, tn]
    # o_ref: [tm, tn], acc_ref: f32 [tm, tn] scratch, resident across the K axis.
    k = pl.program_id(2)

    @pl.when(k == 0)
    def _():
        acc_ref[...] = jnp.zeros_like(acc_ref)

    # MXU-native [M,K] x [K,N]; f32 accumulation regardless of input dtype.
    acc_ref[...] += jnp.dot(x_ref[...], w_ref[...],
                            preferred_element_type=jnp.float32)

    @pl.when(k == pl.num_programs(2) - 1)
    def _():
        o_ref[...] = (acc_ref[...] + b_ref[...]).astype(o_ref.dtype)


def slot_classifier_forward(x, weight, bias, *, compute_dtype=None,
                            tm_target=1024):
    """Forward of SlotClassifier (eval-mode dropout == identity, then Linear).

    x:      [B, S, D]
    weight: [N, D]   (PyTorch nn.Linear layout; transposed once here)
    bias:   [N]
    compute_dtype: optional (e.g. jnp.bfloat16) to stream x/W at half width
                   with f32 accumulation.  Output keeps x.dtype.
    returns [B, S, N]
    """
    B, S, D = x.shape
    N = weight.shape[0]
    M = B * S

    in_dtype = jnp.dtype(compute_dtype) if compute_dtype is not None else jnp.dtype(x.dtype)
    out_dtype = jnp.dtype(x.dtype)
    x_bytes = in_dtype.itemsize
    w_bytes = x_bytes
    o_bytes = out_dtype.itemsize

    # Sublane granularity: 16 for packed (bf16) inputs, else 8.
    sub = 16 if x_bytes < 4 else 8

    # Lane-dense output: pad the label dim up to a multiple of 128.
    n_pad = _round_up(max(N, 128), 128)

    # ---------------- generation-aware VMEM budget ----------------
    try:
        vmem_cap = int(pltpu.get_tpu_info().vmem_capacity_bytes)
    except Exception:
        vmem_cap = 64 << 20
    if vmem_cap <= (64 << 20):            # v7x-class: 64 MiB per TC
        budget, vmem_limit = 28 << 20, 56 << 20
    else:                                 # v5e / v6e: 128 MiB
        budget, vmem_limit = 96 << 20, 110 << 20

    def footprint(tm_, tn_, tk_):
        # x / weight / out all get 2 pipeline buffers (the weight is
        # grid-invariant but Pallas still allocates buffer_count buffers),
        # plus the f32 accumulator scratch and the (tiny) bias.
        return (2 * tm_ * tk_ * x_bytes
                + 2 * tk_ * tn_ * w_bytes
                + 2 * tm_ * tn_ * o_bytes
                + 2 * tn_ * 4
                + tm_ * tn_ * 4)

    # ---------------- tile selection ----------------
    tn, tk, d_pad = n_pad, D, D
    tm = _round_up(min(tm_target, max(M, sub)), sub)
    # Keep at least 2 M-steps so the "parallel" M axis can shard across the
    # two TensorCores on v7x (harmless on single-TC v5e/v6e).
    if M > sub:
        tm = min(tm, _round_up(_cdiv(M, 2), sub))
    tm = min(tm, _round_up(M, sub))

    # Shrink M tile first (but keep it big enough to amortize grid overhead).
    while footprint(tm, tn, tk) > budget and tm > 256:
        tm = max(256, _round_up(tm // 2, sub))
    # Then tile the (padded) label dim.
    while footprint(tm, tn, tk) > budget and tn > 128:
        tn = max(128, _round_up(tn // 2, 128))
    # Last resort for very large D: tile the contraction dim (requires D padded
    # to a multiple of tk -> one extra pass over x; only hit for huge heads).
    if footprint(tm, tn, tk) > budget and D > 128:
        fixed = 2 * tm * tn * o_bytes + tm * tn * 4 + 2 * tn * 4
        per_k = 2 * tm * x_bytes + 2 * tn * w_bytes
        tk = max(128, ((budget - fixed) // per_k) // 128 * 128)
        d_pad = _round_up(D, tk)
    # Absolute fallback: keep shrinking tm so we always compile.
    while footprint(tm, tn, tk) > budget and tm > sub:
        tm = max(sub, _round_up(tm // 2, sub))

    gm = _cdiv(M, tm)
    gn = _cdiv(n_pad, tn)
    gk = _cdiv(d_pad, tk)          # d_pad is a multiple of tk by construction

    # ---------------- operand prep (one-time / free) ----------------
    x2d = x.reshape(M, D)                               # free view: no M padding
    if d_pad != D:                                      # only in the K-tiled path
        x2d = jnp.pad(x2d, ((0, 0), (0, d_pad - D)))
    if x2d.dtype != in_dtype:
        x2d = x2d.astype(in_dtype)

    # One-time weight transpose to MXU-native [d_pad, n_pad] (small vs x).
    w_t = jnp.pad(weight, ((0, n_pad - N), (0, d_pad - D))).T
    if w_t.dtype != in_dtype:
        w_t = w_t.astype(in_dtype)
    b2d = jnp.pad(bias.astype(jnp.float32), (0, n_pad - N)).reshape(1, n_pad)

    cost = pl.CostEstimate(
        flops=2 * M * d_pad * n_pad,
        transcendentals=0,
        bytes_accessed=(M * d_pad * x_bytes + d_pad * n_pad * w_bytes
                        + M * n_pad * o_bytes + n_pad * 4),
    )

    out2d = pl.pallas_call(
        _slot_classifier_kernel,
        out_shape=jax.ShapeDtypeStruct((M, n_pad), out_dtype),
        grid_spec=pltpu.PrefetchScalarGridSpec(
            num_scalar_prefetch=0,
            grid=(gm, gn, gk),
            in_specs=[
                pl.BlockSpec((tm, tk), lambda i, j, k: (i, k)),   # streamed x
                pl.BlockSpec((tk, tn), lambda i, j, k: (k, j)),   # weight [D, n_pad]
                pl.BlockSpec((1, tn), lambda i, j, k: (0, j)),    # bias
            ],
            out_specs=pl.BlockSpec((tm, tn), lambda i, j, k: (i, j)),
            scratch_shapes=[pltpu.VMEM((tm, tn), jnp.float32)],
        ),
        compiler_params=pltpu.CompilerParams(
            # M and N tiles are independent; K is the reduction axis.
            dimension_semantics=("parallel", "parallel", "arbitrary"),
            vmem_limit_bytes=int(vmem_limit),
        ),
        cost_estimate=cost,
    )(x2d, w_t, b2d)

    # Reshape of the leading dim is free; the label-dim slice is left for XLA
    # to fuse into the consumer under jit (no extra forced output pass here).
    return out2d.reshape(B, S, n_pad)[..., :N]


if __name__ == "__main__":
    # Deterministic parameter init (matches nn.Linear shapes):
    #   linear.weight: [num_slot_labels, input_dim], linear.bias: [num_slot_labels]
    batch, seq, input_dim, num_slot_labels = 2, 8, 32, 16

    key = jax.random.PRNGKey(0)
    kx, kw, kb = jax.random.split(key, 3)

    x = jax.random.normal(kx, (batch, seq, input_dim), dtype=jnp.float32)
    bound = 1.0 / (input_dim ** 0.5)
    weight = jax.random.uniform(kw, (num_slot_labels, input_dim),
                                minval=-bound, maxval=bound, dtype=jnp.float32)
    bias = jax.random.uniform(kb, (num_slot_labels,),
                              minval=-bound, maxval=bound, dtype=jnp.float32)

    ref = x @ weight.T + bias

    # Full-precision (f32) streaming path.
    out = slot_classifier_forward(x, weight, bias)
    jax.block_until_ready(out)
    assert out.shape == (batch, seq, num_slot_labels)
    assert jnp.allclose(out, ref, atol=1e-5, rtol=1e-5)

    # Bandwidth-optimized path: bf16 streaming of x / W, f32 accumulation.
    out_bf16 = slot_classifier_forward(x, weight, bias,
                                       compute_dtype=jnp.bfloat16)
    jax.block_until_ready(out_bf16)
    assert out_bf16.shape == (batch, seq, num_slot_labels)
    assert out_bf16.dtype == x.dtype
    assert jnp.allclose(out_bf16, ref, atol=1e-1, rtol=1e-1)

    print("KERNEL_OK")
</pallas_src>

<mosaic_0001>
module attributes {stable_mosaic.version = 11 : i64} {
  func.func @_slot_classifier_kernel(%arg0: i32, %arg1: i32, %arg2: i32, %arg3: memref<8x32xf32, #tpu.memory_space<vmem>>, %arg4: memref<32x128xf32, #tpu.memory_space<vmem>>, %arg5: memref<1x128xf32, #tpu.memory_space<vmem>>, %arg6: memref<8x128xf32, #tpu.memory_space<vmem>>, %arg7: memref<8x128xf32, #tpu.memory_space<vmem>>) attributes {dimension_semantics = [#tpu.dimension_semantics<parallel>, #tpu.dimension_semantics<parallel>, #tpu.dimension_semantics<arbitrary>], iteration_bounds = array<i64: 2, 1, 1>, scalar_prefetch = 0 : i64, scratch_operands = 1 : i64, tpu.core_type = #tpu.core_type<tc>, window_params = [{transform_indices = @transform_0, window_bounds = array<i64: 8, 32>}, {transform_indices = @transform_1, window_bounds = array<i64: 32, 128>}, {transform_indices = @transform_2, window_bounds = array<i64: 1, 128>}, {transform_indices = @transform_3, window_bounds = array<i64: 8, 128>}]} {
    %c0_i32 = arith.constant 0 : i32
    %0 = arith.cmpi eq, %arg2, %c0_i32 : i32
    %1 = arith.extui %0 : i1 to i32
    %c0_i32_0 = arith.constant 0 : i32
    %2 = arith.cmpi ne, %1, %c0_i32_0 : i32
    scf.if %2 {
      %cst_10 = arith.constant 0.000000e+00 : f32
      %12 = vector.broadcast %cst_10 : f32 to vector<8x128xf32>
      %c0_11 = arith.constant 0 : index
      %c0_12 = arith.constant 0 : index
      %13 = vector.load %arg7[%c0_11, %c0_12] : memref<8x128xf32, #tpu.memory_space<vmem>>, vector<8x128xf32>
      tpu.vector_store %arg7[%c0_11, %c0_12], %12 {strides = array<i32>} : memref<8x128xf32, #tpu.memory_space<vmem>>, vector<8x128xf32>,
    } else {
    }
    %c0 = arith.constant 0 : index
    %c0_1 = arith.constant 0 : index
    %3 = vector.load %arg7[%c0, %c0_1] : memref<8x128xf32, #tpu.memory_space<vmem>>, vector<8x128xf32>
    %c0_2 = arith.constant 0 : index
    %c0_3 = arith.constant 0 : index
    %4 = vector.load %arg3[%c0_2, %c0_3] : memref<8x32xf32, #tpu.memory_space<vmem>>, vector<8x32xf32>
    %c0_4 = arith.constant 0 : index
    %c0_5 = arith.constant 0 : index
    %5 = vector.load %arg4[%c0_4, %c0_5] : memref<32x128xf32, #tpu.memory_space<vmem>>, vector<32x128xf32>
    %cst = arith.constant dense<0.000000e+00> : vector<8x128xf32>
    %6 = tpu.matmul %4, %5, %cst {dimension_numbers = #tpu.dot_dimension_numbers<[1], [0], [0], [1], [0, 0, 1, 1], [], []>} : vector<8x32xf32>, vector<32x128xf32>, vector<8x128xf32> -> vector<8x128xf32>
    %7 = arith.addf %3, %6 : vector<8x128xf32>
    %c0_6 = arith.constant 0 : index
    %c0_7 = arith.constant 0 : index
    %8 = vector.load %arg7[%c0_6, %c0_7] : memref<8x128xf32, #tpu.memory_space<vmem>>, vector<8x128xf32>
    tpu.vector_store %arg7[%c0_6, %c0_7], %7 {strides = array<i32>} : memref<8x128xf32, #tpu.memory_space<vmem>>, vector<8x128xf32>,
    %c0_i32_8 = arith.constant 0 : i32
    %9 = arith.cmpi eq, %arg2, %c0_i32_8 : i32
    %10 = arith.extui %9 : i1 to i32
    %c0_i32_9 = arith.constant 0 : i32
    %11 = arith.cmpi ne, %10, %c0_i32_9 : i32
    scf.if %11 {
      %c0_10 = arith.constant 0 : index
      %c0_11 = arith.constant 0 : index
      %12 = vector.load %arg7[%c0_10, %c0_11] : memref<8x128xf32, #tpu.memory_space<vmem>>, vector<8x128xf32>
      %c0_12 = arith.constant 0 : index
      %c0_13 = arith.constant 0 : index
      %13 = vector.load %arg5[%c0_12, %c0_13] : memref<1x128xf32, #tpu.memory_space<vmem>>, vector<1x128xf32>
      %14 = vector.broadcast %13 : vector<1x128xf32> to vector<8x128xf32>
      %15 = arith.addf %12, %14 : vector<8x128xf32>
      %c0_14 = arith.constant 0 : index
      %c0_15 = arith.constant 0 : index
      %16 = vector.load %arg6[%c0_14, %c0_15] : memref<8x128xf32, #tpu.memory_space<vmem>>, vector<8x128xf32>
      tpu.vector_store %arg6[%c0_14, %c0_15], %15 {strides = array<i32>} : memref<8x128xf32, #tpu.memory_space<vmem>>, vector<8x128xf32>,
    } else {
    }
    return
  }
  func.func @transform_0(%arg0: i32, %arg1: i32, %arg2: i32) -> (i32, i32) {
    %c0_i32 = arith.constant 0 : i32
    return %arg0, %arg2 : i32, i32
  }
  func.func @transform_1(%arg0: i32, %arg1: i32, %arg2: i32) -> (i32, i32) {
    %c0_i32 = arith.constant 0 : i32
    return %arg2, %arg1 : i32, i32
  }
  func.func @transform_2(%arg0: i32, %arg1: i32, %arg2: i32) -> (i32, i32) {
    %c0_i32 = arith.constant 0 : i32
    %c0_i32_0 = arith.constant 0 : i32
    return %c0_i32, %arg1 : i32, i32
  }
  func.func @transform_3(%arg0: i32, %arg1: i32, %arg2: i32) -> (i32, i32) {
    %c0_i32 = arith.constant 0 : i32
    return %arg0, %arg1 : i32, i32
  }
}

</mosaic_0001>

<llo_original>
// kernel: tpu_custom_call.1
$region0: #{tpu_custom_call.1}
  #allocation0 [shape = 'u32[]', space=smem, size = 0x4, offset = 0x4, fixed_abs, tag = 'smem constant byte address 0x4 - core index']
  #allocation1 [shape = 'u32[72,128]{1,0:T(1,128)}', space=vmem, size = 0x9000, scoped, tag = 'internal scratch']
  #allocation2 [shape = 'f32[8,128]{1,0:T(8,128)}', space=vmem, size = 0x1000, scoped, tag = 'scratch operand']
  %s0 = inlined_call_operand.hbm [shape: f32[16,32], index: 0, kind: input, shape index: {}]
  %s1 = inlined_call_operand.hbm [shape: f32[32,128], index: 1, kind: input, shape index: {}]
  %s2 = inlined_call_operand.vmem [shape: f32[1,128], index: 2, kind: input, shape index: {}]
  %s3 = inlined_call_operand.hbm [shape: f32[16,128], index: 3, kind: output, shape index: {}]
  %s4 = sld [smem:[#allocation0]]
  $region61: #{tpu_custom_call.1} parent=0
    _
  %s6 = ssub.s32 1, %s4
  %s7 = scalar_select 0, %s6, %s4
  $region1: #{tpu_custom_call.1} parent=0
    #allocation3 [shape = 'u8[8192]{0}', space=vmem, size = 0x2000, scoped, tag = 'input window, operand 0']
    #allocation4 [shape = 's32[2]{0}', space=sflag, size = 0x8, scoped, tag = 'scoped memory for tpu_custom_call.1']
    #allocation5 [shape = 's32[2]{0}', space=sflag, size = 0x8, scoped, tag = 'scoped memory for tpu_custom_call.1']
    #allocation6 [shape = 'u8[16384]{0}', space=vmem, size = 0x4000, scoped, tag = 'input window, operand 1, single buffered']
    #allocation7 [shape = 's32[1]{0}', space=sflag, size = 0x4, scoped, tag = 'scoped memory for tpu_custom_call.1']
    #allocation8 [shape = 'u8[8192]{0}', space=vmem, size = 0x2000, scoped, tag = 'output window, operand 0']
    %8 = vsyncpa [#allocation4], 0
    %s9 = scalar_lea.sflag [#allocation4], 1
    %10 = vsyncpa %s9, 0
    %11 = vsyncpa [#allocation7], 0
    %12 = vsyncpa [#allocation5], 0
    %s13 = scalar_lea.sflag [#allocation5], 1
    %14 = vsyncpa %s13, 0
    loop: start=0, step=1, limit=4
    $region2: #{tpu_custom_call.1} parent=1 // loop_pre_header
      _
    $region3: #{tpu_custom_call.1} parent=1 // loop_header
      %s16 = sphi 0, %s20
      %p17 = scmp.ge.s32.totalorder %s16, 4
      %s23 = sphi 0, %s42
      %s24 = sphi 0, %s38
      %s25 = sphi 0, %s34
      %s26 = sphi 0, %s23
      %s27 = sphi 0, %s24
      %s28 = sphi 0, %s25
      %s29 = sphi 0, %s26
      %s30 = sphi 0, %s27
      %s31 = sphi 0, %s28
      %s47 = sphi 0, %s49
      %s50 = sphi 0, %s47
      %s51 = sphi 0, %s50
      %s67 = sphi 0, %s51
      %s75 = sphi 0, %s77
      %s78 = sphi 0, %s75
      %s79 = sphi 0, %s78
      %s95 = sphi 0, %s79
      %s101 = sphi 0, %s103
      %s104 = sphi 0, %s101
      %s105 = sphi 0, %s104
      %s121 = sphi 0, %s105
      %s129 = sphi 0, %s131
      %s132 = sphi 0, %s129
      %s133 = sphi 0, %s132
      %s149 = sphi 0, %s133
    $region4: #{tpu_custom_call.1} parent=1 // loop_header_branch
      %19 = sbr.rel (%p17) target = $region8
    $region5: #{tpu_custom_call.1} parent=1 // loop_body
      %s21 = ssub.s32 %s16, 1
      %s22 = ssub.s32 %s16, 2
      %s32 = sadd.s32 1, %s25
      %p33 = scmp.ge.s32.totalorder %s32, 1
      %s34 = scalar_select %p33, 0, %s32
      %s35 = sadd.s32 1, %s24
      %s36 = scalar_select %p33, %s35, %s24
      %p37 = scmp.ge.s32.totalorder %s36, 1
      %s38 = scalar_select %p37, 0, %s36
      %s39 = sadd.s32 1, %s23
      %s40 = scalar_select %p37, %s39, %s23
      %p41 = scmp.ge.s32.totalorder %s40, 2
      %s42 = scalar_select %p41, 0, %s40
      %s43 = ssub.s32 %s23, %s42
      %s44 = ssub.s32 %s25, %s34
      %s45 = sor.u32 %s43, %s44
      %p46 = scmp.eq.s32.totalorder %s45, 0
      %s48 = sadd.s32 %s47, 1
      %s49 = scalar_select %p46, %s47, %s48
      %p52 = pneg %p46
      %p53 = scmp.eq.s32.totalorder %s16, 1
      %p54 = por %p52, %p53
      %p55 = scmp.ne.s32.totalorder %s47, %s50
      %p56 = scmp.eq.s32.totalorder %s16, 0
      %p57 = por %p55, %p56
      %p58 = scmp.ne.s32.totalorder %s47, %s50
      %p59 = scmp.eq.s32.totalorder %s21, 1
      %p60 = por %p58, %p59
      %p61 = scmp.ne.s32.totalorder %s50, %s51
      %p62 = scmp.eq.s32.totalorder %s21, 0
      %p63 = por %p61, %p62
      %p64 = scmp.ne.s32.totalorder %s50, %s51
      %p65 = scmp.eq.s32.totalorder %s22, 1
      %p66 = por %p64, %p65
      %p68 = scmp.ne.s32.totalorder %s51, %s67
      %p69 = scmp.eq.s32.totalorder %s22, 0
      %p70 = por %p68, %p69
      %s71 = ssub.s32 %s25, %s34
      %s72 = ssub.s32 %s24, %s38
      %s73 = sor.u32 %s71, %s72
      %p74 = scmp.eq.s32.totalorder %s73, 0
      %s76 = sadd.s32 %s75, 1
      %s77 = scalar_select %p74, %s75, %s76
      %p80 = pneg %p74
      %p81 = scmp.eq.s32.totalorder %s16, 1
      %p82 = por %p80, %p81
      %p83 = scmp.ne.s32.totalorder %s75, %s78
      %p84 = scmp.eq.s32.totalorder %s16, 0
      %p85 = por %p83, %p84
      %p86 = scmp.ne.s32.totalorder %s75, %s78
      %p87 = scmp.eq.s32.totalorder %s21, 1
      %p88 = por %p86, %p87
      %p89 = scmp.ne.s32.totalorder %s78, %s79
      %p90 = scmp.eq.s32.totalorder %s21, 0
      %p91 = por %p89, %p90
      %p92 = scmp.ne.s32.totalorder %s78, %s79
      %p93 = scmp.eq.s32.totalorder %s22, 1
      %p94 = por %p92, %p93
      %p96 = scmp.ne.s32.totalorder %s79, %s95
      %p97 = scmp.eq.s32.totalorder %s22, 0
      %p98 = por %p96, %p97
      %s99 = ssub.s32 %s24, %s38
      %p100 = scmp.eq.s32.totalorder %s99, 0
      %s102 = sadd.s32 %s101, 1
      %s103 = scalar_select %p100, %s101, %s102
      %p106 = pneg %p100
      %p107 = scmp.eq.s32.totalorder %s16, 1
      %p108 = por %p106, %p107
      %p109 = scmp.ne.s32.totalorder %s101, %s104
      %p110 = scmp.eq.s32.totalorder %s16, 0
      %p111 = por %p109, %p110
      %p112 = scmp.ne.s32.totalorder %s101, %s104
      %p113 = scmp.eq.s32.totalorder %s21, 1
      %p114 = por %p112, %p113
      %p115 = scmp.ne.s32.totalorder %s104, %s105
      %p116 = scmp.eq.s32.totalorder %s21, 0
      %p117 = por %p115, %p116
      %p118 = scmp.ne.s32.totalorder %s104, %s105
      %p119 = scmp.eq.s32.totalorder %s22, 1
      %p120 = por %p118, %p119
      %p122 = scmp.ne.s32.totalorder %s105, %s121
      %p123 = scmp.eq.s32.totalorder %s22, 0
      %p124 = por %p122, %p123
      %s125 = ssub.s32 %s23, %s42
      %s126 = ssub.s32 %s24, %s38
      %s127 = sor.u32 %s125, %s126
      %p128 = scmp.eq.s32.totalorder %s127, 0
      %s130 = sadd.s32 %s129, 1
      %s131 = scalar_select %p128, %s129, %s130
      %p134 = pneg %p128
      %p135 = scmp.eq.s32.totalorder %s16, 1
      %p136 = por %p134, %p135
      %p137 = scmp.ne.s32.totalorder %s129, %s132
      %p138 = scmp.eq.s32.totalorder %s16, 0
      %p139 = por %p137, %p138
      %p140 = scmp.ne.s32.totalorder %s129, %s132
      %p141 = scmp.eq.s32.totalorder %s21, 1
      %p142 = por %p140, %p141
      %p143 = scmp.ne.s32.totalorder %s132, %s133
      %p144 = scmp.eq.s32.totalorder %s21, 0
      %p145 = por %p143, %p144
      %p146 = scmp.ne.s32.totalorder %s132, %s133
      %p147 = scmp.eq.s32.totalorder %s22, 1
      %p148 = por %p146, %p147
      %p150 = scmp.ne.s32.totalorder %s133, %s149
      %p151 = scmp.eq.s32.totalorder %s22, 0
      %p152 = por %p150, %p151
      %p153 = scmp.le.s32.totalorder 1, %s16
      %p154 = scmp.lt.s32.totalorder %s16, 3
      %p155 = pnand %p153, %p154
      %p156 = pneg %p155
      // Predicated region
      $region9: #{tpu_custom_call.1} parent=5 // pred_check
        _
      $region10: #{tpu_custom_call.1} parent=5 // pred_check_branch
        %158 = sbr.rel (%p155) target = $region12
      $region11: #{tpu_custom_call.1} parent=5 // pred_region
        %s159 = ssub.s32 %s16, 1
        // Predicated region
        $region13: #{tpu_custom_call.1} parent=11 // pred_check
          %p160 = pneg %p91
        $region14: #{tpu_custom_call.1} parent=11 // pred_check_branch
          %162 = sbr.rel (%p160) target = $region16
        $region15: #{tpu_custom_call.1} parent=11 // pred_region
          %s163 = smul.u32 4, %s28
          %165 = vsyncadd [#allocation7], 0
          %s166 = sadd.s32 %s27, %s163
          %s167 = smul.addr %s166, 8
          %s168 = scalar_lea.hbm %s1, %s167
          %s169 = sshll.u32 %s168, 4
          %s170 = int_to_ptr.hbm [resolvable:$true] %s169
          %s171 = sshll.u32 [#allocation6], 4
          %s172 = int_to_ptr.vmem [resolvable:$true] %s171
          %177 = dma.hbm_to_vmem [thread:$0]  %s170, 512, %s172, [#allocation7], 128, 128, 8
        $region16: #{tpu_custom_call.1} parent=11 // pred_fallthru
          _
        // Predicated region
        $region17: #{tpu_custom_call.1} parent=11 // pred_check
          %p178 = pneg %p117
        $region18: #{tpu_custom_call.1} parent=11 // pred_check_branch
          %180 = sbr.rel (%p178) target = $region20
        $region19: #{tpu_custom_call.1} parent=11 // pred_region
          %p181 = scmp.lt.s32.totalorder %s27, 0
          %s182 = scalar_select %p181, %s27, 0
          %s183 = scalar_lea.vmem %s2, %s182
        $region20: #{tpu_custom_call.1} parent=11 // pred_fallthru
          _
      $region12: #{tpu_custom_call.1} parent=5 // pred_fallthru
        _
      %p184 = scmp.lt.s32.totalorder %s16, 2
      // Predicated region
      $region21: #{tpu_custom_call.1} parent=5 // pred_check
        %p185 = pneg %p184
      $region22: #{tpu_custom_call.1} parent=5 // pred_check_branch
        %187 = sbr.rel (%p185) target = $region24
      $region23: #{tpu_custom_call.1} parent=5 // pred_region
        // Predicated region
        $region25: #{tpu_custom_call.1} parent=23 // pred_check
          %p188 = pneg %p57
        $region26: #{tpu_custom_call.1} parent=23 // pred_check_branch
          %190 = sbr.rel (%p188) target = $region28
        $region27: #{tpu_custom_call.1} parent=23 // pred_region
          %s191 = sand.u32 %s47, 1
          %s192 = scalar_lea.sflag [#allocation4], %s191
          %s193 = sand.u32 %s47, 1
          %s194 = smul.addr %s193, 8
          %s195 = scalar_lea.vmem [#allocation3], %s194
          %197 = vsyncadd %s192, 0
          %s198 = sadd.s32 %s25, %s23
          %s199 = smul.addr %s198, 8
          %s200 = scalar_lea.hbm %s0, %s199
          %s202 = sshll.u32 %s200, 4
          %s203 = int_to_ptr.hbm [resolvable:$true] %s202
          %s204 = sshll.u32 %s195, 4
          %s205 = int_to_ptr.vmem [resolvable:$true] %s204
          %207 = dma.hbm_to_vmem [thread:$0]  %s203, 128, %s205, %s192
        $region28: #{tpu_custom_call.1} parent=23 // pred_fallthru
          _
      $region24: #{tpu_custom_call.1} parent=5 // pred_fallthru
        _
      %p208 = scmp.le.s32.totalorder 1, %s16
      %p209 = scmp.lt.s32.totalorder %s16, 3
      %p210 = pnand %p208, %p209
      %p211 = pneg %p210
      // Predicated region
      $region29: #{tpu_custom_call.1} parent=5 // pred_check
        _
      $region30: #{tpu_custom_call.1} parent=5 // pred_check_branch
        %213 = sbr.rel (%p210) target = $region32
      $region31: #{tpu_custom_call.1} parent=5 // pred_region
        %s214 = ssub.s32 %s16, 1
        %s215 = sand.u32 %s50, 1
        %s216 = scalar_lea.sflag [#allocation4], %s215
        %s217 = sand.u32 %s50, 1
        %s218 = smul.addr %s217, 8
        %s219 = scalar_lea.vmem [#allocation3], %s218
        // Predicated region
        $region33: #{tpu_custom_call.1} parent=31 // pred_check
          %p220 = pneg %p63
        $region34: #{tpu_custom_call.1} parent=31 // pred_check_branch
          %222 = sbr.rel (%p220) target = $region36
        $region35: #{tpu_custom_call.1} parent=31 // pred_region
          %224 = dma.done %s216, 128
        $region36: #{tpu_custom_call.1} parent=31 // pred_fallthru
          _
        // Predicated region
        $region37: #{tpu_custom_call.1} parent=31 // pred_check
          %p225 = pneg %p91
        $region38: #{tpu_custom_call.1} parent=31 // pred_check_branch
          %227 = sbr.rel (%p225) target = $region40
        $region39: #{tpu_custom_call.1} parent=31 // pred_region
          %229 = dma.done [#allocation7], 512
        $region40: #{tpu_custom_call.1} parent=31 // pred_fallthru
          _
        %s230 = sand.u32 %s50, 1
        %s231 = scalar_lea.sflag [#allocation4], %s230
        %s232 = sand.u32 %s50, 1
        %s233 = smul.addr %s232, 8
        %s234 = scalar_lea.vmem [#allocation3], %s233
        %p235 = pneg %p63
        %p236 = pneg %p60
        %p237 = pneg %p91
        %p238 = pneg %p88
        %p239 = scmp.lt.s32.totalorder %s27, 0
        %s240 = scalar_select %p239, %s27, 0
        %s241 = scalar_lea.vmem %s2, %s240
        %p242 = pneg %p117
        %p243 = pneg %p114
        %p244 = pneg %p145
        %p245 = pneg %p142
        %s246 = sand.u32 %s132, 1
        %s247 = scalar_lea.sflag [#allocation5], %s246
        %s248 = sand.u32 %s132, 1
        %s249 = smul.addr %s248, 8
        %s250 = scalar_lea.vmem [#allocation8], %s249
        %s251 = smul.u32 4, %s28
        %p252 = scmp.lt.s32.totalorder %s27, 0
        %s253 = scalar_select %p252, %s27, 0
        %s254 = scalar_lea.vmem %s2, %s253
        %p255 = scmp.eq.s32.totalorder %s28, 0
        // Predicated region
        $region41: #{tpu_custom_call.1} parent=31 // pred_check
          %p256 = pneg %p255
        $region42: #{tpu_custom_call.1} parent=31 // pred_check_branch
          %258 = sbr.rel (%p256) target = $region44
        $region43: #{tpu_custom_call.1} parent=31 // pred_region
          %259 = vst [vmem:[#allocation2] sm:$0xff] 0.0
        $region44: #{tpu_custom_call.1} parent=31 // pred_fallthru
          _
        %v260 = vld [vmem:[#allocation2] sm:$0xff]
        %v261 = vld [vmem:[%s219] sm:$0xff]
        %v262 = vld [vmem:[#allocation6] sm:$0xff]
        %v263 = vld [vmem:[#allocation6 + $0x8] sm:$0xff]
        %v264 = vld [vmem:[#allocation6 + $0x10] sm:$0xff]
        %v265 = vld [vmem:[#allocation6 + $0x18] sm:$0xff]
        %vm266 = vcmask 261120
        %v268 = vsel %vm266, %v261, 0
        %270 = vmatpush.msra.mxu0 0.0
        %271 = vmatpush.msra.mxu0 0.0
        %272 = vmatpush.msra.mxu0 0.0
        %273 = vmatpush.msra.mxu0 0.0
        %274 = vmatpush.msra.mxu0 0.0
        %275 = vmatpush.msra.mxu0 0.0
        %276 = vmatpush.msra.mxu0 0.0
        %277 = vmatpush.msra.mxu0 0.0
        %278 = vmatpush.msra.mxu0 0.0
        %279 = vmatpush.msra.mxu0 0.0
        %280 = vmatpush.msra.mxu0 0.0
        %281 = vmatpush.msra.mxu0 0.0
        %282 = vmatpush.msra.mxu0 %v265
        %283 = vmatpush.msra.mxu0 %v264
        %284 = vmatpush.msra.mxu0 %v263
        %285 = vmatpush.msra.mxu0 %v262
        %286 = vmatmul.f32.gmra.mxu0 %v268
        %v287 = vpop.f32.mrf.mxu0
        %v288 = vadd.f32 0.0, %v287
        %289 = vdwg.mxu0
        %v290 = vadd.f32 %v260, %v288
        %291 = vst [vmem:[#allocation2] sm:$0xff] %v290
        // Predicated region
        $region45: #{tpu_custom_call.1} parent=31 // pred_check
          %p292 = pneg %p255
        $region46: #{tpu_custom_call.1} parent=31 // pred_check_branch
          %294 = sbr.rel (%p292) target = $region48
        $region47: #{tpu_custom_call.1} parent=31 // pred_region
          %v295 = vld [vmem:[#allocation2] sm:$0xff]
          %v296 = vld [vmem:[%s254] sm:$0x1]
          %v298 = vperm.slane %v296, 0
          %v300 = vadd.f32 %v295, %v298
          %301 = vst [vmem:[%s250] sm:$0xff] %v300
        $region48: #{tpu_custom_call.1} parent=31 // pred_fallthru
          _
        %s302 = sand.u32 %s132, 1
        %s303 = scalar_lea.sflag [#allocation5], %s302
        %s304 = sand.u32 %s132, 1
        %s305 = smul.addr %s304, 8
        %s306 = scalar_lea.vmem [#allocation8], %s305
        // Predicated region
        $region49: #{tpu_custom_call.1} parent=31 // pred_check
          %p307 = pneg %p142
        $region50: #{tpu_custom_call.1} parent=31 // pred_check_branch
          %309 = sbr.rel (%p307) target = $region52
        $region51: #{tpu_custom_call.1} parent=31 // pred_region
          %311 = vsyncadd %s303, 0
          %s312 = sadd.s32 %s27, %s26
          %s313 = smul.addr %s312, 8
          %s314 = scalar_lea.hbm %s3, %s313
          %s316 = sshll.u32 %s306, 4
          %s317 = int_to_ptr.vmem [resolvable:$true] %s316
          %s318 = sshll.u32 %s314, 4
          %s319 = int_to_ptr.hbm [resolvable:$true] %s318
          %321 = dma.vmem_to_hbm [thread:$0]  %s317, 128, %s319, %s303
        $region52: #{tpu_custom_call.1} parent=31 // pred_fallthru
          _
      $region32: #{tpu_custom_call.1} parent=5 // pred_fallthru
        _
      %p322 = scmp.le.s32.totalorder 2, %s16
      // Predicated region
      $region53: #{tpu_custom_call.1} parent=5 // pred_check
        %p323 = pneg %p322
      $region54: #{tpu_custom_call.1} parent=5 // pred_check_branch
        %325 = sbr.rel (%p323) target = $region56
      $region55: #{tpu_custom_call.1} parent=5 // pred_region
        %s326 = ssub.s32 %s16, 2
        // Predicated region
        $region57: #{tpu_custom_call.1} parent=55 // pred_check
          %p327 = pneg %p148
        $region58: #{tpu_custom_call.1} parent=55 // pred_check_branch
          %329 = sbr.rel (%p327) target = $region60
        $region59: #{tpu_custom_call.1} parent=55 // pred_region
          %s330 = sand.u32 %s133, 1
          %s331 = scalar_lea.sflag [#allocation5], %s330
          %s332 = sand.u32 %s133, 1
          %s333 = smul.addr %s332, 8
          %s334 = scalar_lea.vmem [#allocation8], %s333
          %336 = dma.done %s331, 128
        $region60: #{tpu_custom_call.1} parent=55 // pred_fallthru
          _
      $region56: #{tpu_custom_call.1} parent=5 // pred_fallthru
        _
    $region6: #{tpu_custom_call.1} parent=1 // loop_footer
      %s20 = sadd.s32 1, %s16
    $region7: #{tpu_custom_call.1} parent=1 // loop_footer_branch
      %15 = sbr.rel target = $region3
    $region8: #{tpu_custom_call.1} parent=1 // loop_exit
      _
    %337 = vsyncpa [#allocation4], 1
    %s338 = scalar_lea.sflag [#allocation4], 1
    %339 = vsyncpa %s338, 1
    %340 = vsyncpa [#allocation7], 1
    %341 = vsyncpa [#allocation5], 1
    %s342 = scalar_lea.sflag [#allocation5], 1
    %343 = vsyncpa %s342, 1

</llo_original>
